<compile_context>
chip_gen: v7x
topology: tpu7x:2x2x1
jax: 0.10.0
libtpu: 0.0.40
codegen_flags: <defaults>
</compile_context>

<pallas_src>
import jax
import jax.numpy as jnp
from jax import lax
from jax.experimental import pallas as pl
from jax.experimental.pallas import tpu as pltpu

_BN_EPS = 1e-5
_DEFAULT_TILE_ROWS = 1024  # pixel-tile for the 1x1 kernels (fits v7x VMEM)


def _round_up(x, m):
    return (x + m - 1) // m * m


# --------------------------------------------------------------------------
# Kernel 1a: plain 1x1 conv (channel matmul) + folded BatchNorm affine
#            (used when fuse=False).  Tiled over the pixel axis.
# --------------------------------------------------------------------------
def _conv1x1_bn_kernel(x_ref, w_ref, s_ref, b_ref, o_ref):
    acc = jnp.dot(x_ref[...], w_ref[...], preferred_element_type=jnp.float32)
    o_ref[...] = acc * s_ref[...] + b_ref[...]


def conv1x1_bn(x_flat, w, scale, bias, *, tile_rows=_DEFAULT_TILE_ROWS):
    # x_flat: (P, Cin), w: (Cin, Cout), scale/bias: (1, Cout)
    P, Cin = x_flat.shape
    Cout = w.shape[1]
    TP = min(tile_rows, _round_up(P, 8))
    Pp = _round_up(P, TP)
    if Pp != P:
        x_flat = jnp.pad(x_flat, ((0, Pp - P), (0, 0)))
    out = pl.pallas_call(
        _conv1x1_bn_kernel,
        out_shape=jax.ShapeDtypeStruct((Pp, Cout), jnp.float32),
        grid=(Pp // TP,),
        in_specs=[
            pl.BlockSpec((TP, Cin), lambda i: (i, 0)),
            pl.BlockSpec((Cin, Cout), lambda i: (0, 0)),
            pl.BlockSpec((1, Cout), lambda i: (0, 0)),
            pl.BlockSpec((1, Cout), lambda i: (0, 0)),
        ],
        out_specs=pl.BlockSpec((TP, Cout), lambda i: (i, 0)),
        compiler_params=pltpu.CompilerParams(dimension_semantics=("parallel",)),
    )(x_flat, w, scale, bias)
    return out[:P]


# --------------------------------------------------------------------------
# Kernel 1b (fuse=True): conv1(1x1) + BN + attention + blend, fused.
#   xm = (x @ W1) * s1 + b1
#   l0 = sum_c xm*wax0 + sum_c y*way0 + b0   (VPU mul + XLU lane-reduce)
#   l1 = sum_c xm*wax1 + sum_c y*way1 + b1
#   out = xm * sigmoid(l0) + y * sigmoid(l1)
# The x_mid tile and the 2-wide logits never leave VMEM.
# --------------------------------------------------------------------------
def _fused_conv1_bn_att_kernel(x_ref, y_ref, w1_ref, s1_ref, b1_ref,
                               wax_ref, way_ref, ba_ref, o_ref):
    xm = jnp.dot(x_ref[...], w1_ref[...], preferred_element_type=jnp.float32)
    xm = xm * s1_ref[...] + b1_ref[...]
    y = y_ref[...]
    bb = ba_ref[...]  # (1, 2)
    l0 = (jnp.sum(xm * wax_ref[0:1, :], axis=-1, keepdims=True)
          + jnp.sum(y * way_ref[0:1, :], axis=-1, keepdims=True) + bb[:, 0:1])
    l1 = (jnp.sum(xm * wax_ref[1:2, :], axis=-1, keepdims=True)
          + jnp.sum(y * way_ref[1:2, :], axis=-1, keepdims=True) + bb[:, 1:2])
    z0 = jax.nn.sigmoid(l0)
    z1 = jax.nn.sigmoid(l1)
    o_ref[...] = xm * z0 + y * z1


def fused_conv1_bn_att(x_flat, y_flat, w1, s1, b1, wax, way, ba,
                       *, tile_rows=_DEFAULT_TILE_ROWS):
    # x_flat: (P, Cin); y_flat: (P, Cmid); w1: (Cin, Cmid)
    # wax/way: (2, Cmid); ba: (1, 2)
    P, Cin = x_flat.shape
    Cmid = w1.shape[1]
    TP = min(tile_rows, _round_up(P, 8))
    Pp = _round_up(P, TP)
    if Pp != P:
        x_flat = jnp.pad(x_flat, ((0, Pp - P), (0, 0)))
        y_flat = jnp.pad(y_flat, ((0, Pp - P), (0, 0)))
    out = pl.pallas_call(
        _fused_conv1_bn_att_kernel,
        out_shape=jax.ShapeDtypeStruct((Pp, Cmid), jnp.float32),
        grid=(Pp // TP,),
        in_specs=[
            pl.BlockSpec((TP, Cin), lambda i: (i, 0)),
            pl.BlockSpec((TP, Cmid), lambda i: (i, 0)),
            pl.BlockSpec((Cin, Cmid), lambda i: (0, 0)),
            pl.BlockSpec((1, Cmid), lambda i: (0, 0)),
            pl.BlockSpec((1, Cmid), lambda i: (0, 0)),
            pl.BlockSpec((2, Cmid), lambda i: (0, 0)),
            pl.BlockSpec((2, Cmid), lambda i: (0, 0)),
            pl.BlockSpec((1, 2), lambda i: (0, 0)),
        ],
        out_specs=pl.BlockSpec((TP, Cmid), lambda i: (i, 0)),
        compiler_params=pltpu.CompilerParams(dimension_semantics=("parallel",)),
    )(x_flat, y_flat, w1, s1, b1, wax, way, ba)
    return out[:P]


# --------------------------------------------------------------------------
# Kernel 2: 3x3 conv (pad=1) + folded BatchNorm affine.
# One grid step per image.  Halo is built in a VMEM scratch (no HBM pad),
# accumulation goes into a VMEM f32 scratch, and the 9 taps reuse 3
# column-shifted views (kh shift is an aligned sublane slice when W % 8 == 0).
# --------------------------------------------------------------------------
def _make_conv3x3_bn_kernel(H, W):
    def kernel(x_ref, w_ref, s_ref, b_ref, o_ref, xpad_ref, acc_ref):
        Cin = x_ref.shape[-1]
        HW = H * W
        # In-kernel 1-pixel halo.  The border is re-zeroed every step so the
        # kernel stays correct when the image axis is sharded across cores.
        zrow = jnp.zeros((1, W + 2, Cin), jnp.float32)
        zcol = jnp.zeros((H + 2, 1, Cin), jnp.float32)
        xpad_ref[0:1] = zrow
        xpad_ref[H + 1:H + 2] = zrow
        xpad_ref[:, 0:1, :] = zcol
        xpad_ref[:, W + 1:W + 2, :] = zcol
        xpad_ref[1:H + 1, 1:W + 1, :] = x_ref[0]

        acc_ref[...] = jnp.zeros_like(acc_ref)
        for dw in range(3):
            # One column-shifted view per kw tap (3 relayouts total instead of 9).
            col = xpad_ref[:, dw:dw + W, :].reshape((H + 2) * W, Cin)
            for dh in range(3):
                patch = col[dh * W:(dh + H) * W, :]       # aligned when W % 8 == 0
                acc_ref[...] += jnp.dot(patch, w_ref[dh * 3 + dw],
                                        preferred_element_type=jnp.float32)
        o_ref[0] = acc_ref[...] * s_ref[...] + b_ref[...]
    return kernel


def conv3x3_bn(x_nhwc, w, scale, bias):
    # x_nhwc: (N, H, W, Cin); w: (9, Cin, Cout); scale/bias: (1, Cout)
    N, H, W, Cin = x_nhwc.shape
    Cout = w.shape[-1]
    kernel = _make_conv3x3_bn_kernel(H, W)
    out = pl.pallas_call(
        kernel,
        out_shape=jax.ShapeDtypeStruct((N, H * W, Cout), jnp.float32),
        grid=(N,),
        in_specs=[
            pl.BlockSpec((1, H, W, Cin), lambda n: (n, 0, 0, 0)),
            pl.BlockSpec((9, Cin, Cout), lambda n: (0, 0, 0)),
            pl.BlockSpec((1, Cout), lambda n: (0, 0)),
            pl.BlockSpec((1, Cout), lambda n: (0, 0)),
        ],
        out_specs=pl.BlockSpec((1, H * W, Cout), lambda n: (n, 0, 0)),
        scratch_shapes=[
            pltpu.VMEM((H + 2, W + 2, Cin), jnp.float32),   # halo-padded image
            pltpu.VMEM((H * W, Cout), jnp.float32),         # f32 accumulator
        ],
        compiler_params=pltpu.CompilerParams(dimension_semantics=("parallel",)),
    )(x_nhwc, w, scale, bias)
    return out.reshape(N, H, W, Cout)


# --------------------------------------------------------------------------
# Glue: nearest-neighbor resize (F.interpolate mode='nearest' semantics).
# --------------------------------------------------------------------------
def nearest_resize_nhwc(t, out_h, out_w):
    _, h, w, _ = t.shape
    hi = (jnp.arange(out_h) * h) // out_h
    wi = (jnp.arange(out_w) * w) // out_w
    return t[:, hi][:, :, wi]


def nearest_resize_nchw(t, out_h, out_w):
    _, _, h, w = t.shape
    hi = (jnp.arange(out_h) * h) // out_h
    wi = (jnp.arange(out_w) * w) // out_w
    return t[:, :, hi][:, :, :, wi]


# --------------------------------------------------------------------------
# ABF forward (wrapper). Input/output NCHW, like PyTorch.
# --------------------------------------------------------------------------
def abf_forward(params, x_nchw, y_nchw=None, shape=None, out_shape=None):
    n, cin, h, w = x_nchw.shape
    cmid = params['w1'].shape[1]
    x = jnp.transpose(x_nchw, (0, 2, 3, 1)).astype(jnp.float32)  # NHWC
    x_flat = x.reshape(n * h * w, cin)

    if params.get('att_wx') is not None and y_nchw is not None:
        y_nhwc = jnp.transpose(y_nchw, (0, 2, 3, 1)).astype(jnp.float32)
        y_nhwc = nearest_resize_nhwc(y_nhwc, shape, shape)
        y_flat = y_nhwc.reshape(n * h * w, cmid)
        x_mid = fused_conv1_bn_att(
            x_flat, y_flat, params['w1'], params['bn1_scale'], params['bn1_bias'],
            params['att_wx'], params['att_wy'], params['att_b'])
    else:
        x_mid = conv1x1_bn(x_flat, params['w1'],
                           params['bn1_scale'], params['bn1_bias'])

    x_nhwc = x_mid.reshape(n, h, w, cmid)
    if x_nhwc.shape[2] != out_shape:
        x_nhwc = nearest_resize_nhwc(x_nhwc, out_shape, out_shape)

    y_out = conv3x3_bn(x_nhwc, params['w2'],
                       params['bn2_scale'], params['bn2_bias'])

    return (jnp.transpose(y_out, (0, 3, 1, 2)),
            jnp.transpose(x_nhwc, (0, 3, 1, 2)))


# --------------------------------------------------------------------------
# Deterministic parameter init mirroring ABF.__init__ shapes/init rules.
# BatchNorm in eval mode with fresh stats (gamma=1, beta=0, mean=0, var=1,
# eps=1e-5) folded into a per-channel (scale, bias) pair.
# --------------------------------------------------------------------------
def init_params(key, in_channel, mid_channel, out_channel, fuse):
    k1, k2, k3, k4 = jax.random.split(key, 4)
    # conv1: kaiming_uniform_(a=1) -> bound = sqrt(3 / fan_in), fan_in = in_channel
    b1 = (3.0 / in_channel) ** 0.5
    w1_oihw = jax.random.uniform(k1, (mid_channel, in_channel, 1, 1),
                                 jnp.float32, -b1, b1)
    # conv2: kaiming_uniform_(a=1) -> fan_in = mid_channel * 9
    b2 = (3.0 / (mid_channel * 9)) ** 0.5
    w2_oihw = jax.random.uniform(k2, (out_channel, mid_channel, 3, 3),
                                 jnp.float32, -b2, b2)

    bn_scale = float(1.0 / (1.0 + _BN_EPS) ** 0.5)  # gamma / sqrt(var + eps)
    params = {
        'w1_oihw': w1_oihw,
        'w2_oihw': w2_oihw,
        # Pallas-friendly layouts
        'w1': jnp.transpose(w1_oihw[:, :, 0, 0], (1, 0)),                 # (Cin, Cmid)
        'w2': jnp.transpose(w2_oihw, (2, 3, 1, 0)).reshape(9, mid_channel, out_channel),
        'bn1_scale': jnp.full((1, mid_channel), bn_scale, jnp.float32),
        'bn1_bias': jnp.zeros((1, mid_channel), jnp.float32),
        'bn2_scale': jnp.full((1, out_channel), bn_scale, jnp.float32),
        'bn2_bias': jnp.zeros((1, out_channel), jnp.float32),
        'att_wx': None,
        'att_wy': None,
    }
    if fuse:
        fan_in_a = 2 * mid_channel
        ba = (1.0 / fan_in_a) ** 0.5   # default Conv2d kaiming_uniform(a=sqrt(5))
        wa_oihw = jax.random.uniform(k3, (2, fan_in_a, 1, 1), jnp.float32, -ba, ba)
        bb = 1.0 / fan_in_a ** 0.5
        batt = jax.random.uniform(k4, (2,), jnp.float32, -bb, bb)
        wa = wa_oihw[:, :, 0, 0]                                           # (2, 2*Cmid)
        params.update({
            'att_w_oihw': wa_oihw,
            'att_b_raw': batt,
            'att_wx': wa[:, :mid_channel],       # (2, Cmid) weights on x-branch
            'att_wy': wa[:, mid_channel:],       # (2, Cmid) weights on y-branch
            'att_b': batt.reshape(1, 2),
        })
    return params


# --------------------------------------------------------------------------
# Pure-JAX reference (lax convolutions) for correctness checking.
# --------------------------------------------------------------------------
def ref_forward(params, x_nchw, y_nchw, shape, out_shape):
    dn = ('NCHW', 'OIHW', 'NCHW')
    bn = 1.0 / jnp.sqrt(1.0 + _BN_EPS)
    x1 = lax.conv_general_dilated(x_nchw, params['w1_oihw'], (1, 1), 'VALID',
                                  dimension_numbers=dn) * bn
    if params.get('att_w_oihw') is not None and y_nchw is not None:
        yr = nearest_resize_nchw(y_nchw, shape, shape)
        z = jnp.concatenate([x1, yr], axis=1)
        z = lax.conv_general_dilated(z, params['att_w_oihw'], (1, 1), 'VALID',
                                     dimension_numbers=dn)
        z = jax.nn.sigmoid(z + params['att_b_raw'][None, :, None, None])
        x1 = x1 * z[:, 0:1] + yr * z[:, 1:2]
    if x1.shape[-1] != out_shape:
        x1 = nearest_resize_nchw(x1, out_shape, out_shape)
    y2 = lax.conv_general_dilated(x1, params['w2_oihw'], (1, 1),
                                  ((1, 1), (1, 1)), dimension_numbers=dn) * bn
    return y2, x1


if __name__ == "__main__":
    key = jax.random.PRNGKey(0)
    kx, ky, kp, kp2 = jax.random.split(key, 4)

    N, Cin, Cmid, Cout = 2, 8, 16, 16
    H = W = 8
    shape = 8        # y is upsampled (nearest) to x's spatial size
    out_shape = 16   # triggers the second nearest-neighbor upsample before conv2

    x = jax.random.normal(kx, (N, Cin, H, W), jnp.float32)
    y = jax.random.normal(ky, (N, Cmid, 4, 4), jnp.float32)

    # fuse=True path: fused conv1+BN+attention kernel, then 3x3+BN kernel.
    params = init_params(kp, Cin, Cmid, Cout, fuse=True)
    out_y, out_x = abf_forward(params, x, y, shape=shape, out_shape=out_shape)
    out_y = jax.block_until_ready(out_y)
    out_x = jax.block_until_ready(out_x)
    ref_y, ref_x = ref_forward(params, x, y, shape, out_shape)
    assert out_y.shape == (N, Cout, out_shape, out_shape)
    assert out_x.shape == (N, Cmid, out_shape, out_shape)
    assert jnp.allclose(out_y, ref_y, atol=1e-4, rtol=1e-4)
    assert jnp.allclose(out_x, ref_x, atol=1e-4, rtol=1e-4)

    # fuse=False path: plain tiled conv1x1+BN kernel, no resize before conv2.
    params2 = init_params(kp2, Cin, Cmid, Cout, fuse=False)
    out_y2, out_x2 = abf_forward(params2, x, None, shape=None, out_shape=W)
    out_y2 = jax.block_until_ready(out_y2)
    ref_y2, ref_x2 = ref_forward(params2, x, None, None, W)
    assert jnp.allclose(out_y2, ref_y2, atol=1e-4, rtol=1e-4)
    assert jnp.allclose(out_x2, ref_x2, atol=1e-4, rtol=1e-4)

    print("KERNEL_OK")
</pallas_src>

<mosaic_0001>
module attributes {stable_mosaic.version = 11 : i64} {
  func.func @_fused_conv1_bn_att_kernel(%arg0: i32, %arg1: memref<128x8xf32, #tpu.memory_space<vmem>>, %arg2: memref<128x16xf32, #tpu.memory_space<vmem>>, %arg3: memref<8x16xf32, #tpu.memory_space<vmem>>, %arg4: memref<1x16xf32, #tpu.memory_space<vmem>>, %arg5: memref<1x16xf32, #tpu.memory_space<vmem>>, %arg6: memref<2x16xf32, #tpu.memory_space<vmem>>, %arg7: memref<2x16xf32, #tpu.memory_space<vmem>>, %arg8: memref<1x2xf32, #tpu.memory_space<vmem>>, %arg9: memref<128x16xf32, #tpu.memory_space<vmem>>) attributes {dimension_semantics = [#tpu.dimension_semantics<parallel>], iteration_bounds = array<i64: 1>, scalar_prefetch = 0 : i64, scratch_operands = 0 : i64, tpu.core_type = #tpu.core_type<tc>, window_params = [{transform_indices = @transform_0, window_bounds = array<i64: 128, 8>}, {transform_indices = @transform_1, window_bounds = array<i64: 128, 16>}, {pipeline_mode = #tpu.pipeline_mode<synchronous>, transform_indices = @transform_2, window_bounds = array<i64: 8, 16>}, {pipeline_mode = #tpu.pipeline_mode<synchronous>, transform_indices = @transform_3, window_bounds = array<i64: 1, 16>}, {pipeline_mode = #tpu.pipeline_mode<synchronous>, transform_indices = @transform_4, window_bounds = array<i64: 1, 16>}, {pipeline_mode = #tpu.pipeline_mode<synchronous>, transform_indices = @transform_5, window_bounds = array<i64: 2, 16>}, {pipeline_mode = #tpu.pipeline_mode<synchronous>, transform_indices = @transform_6, window_bounds = array<i64: 2, 16>}, {pipeline_mode = #tpu.pipeline_mode<synchronous>, transform_indices = @transform_7, window_bounds = array<i64: 1, 2>}, {transform_indices = @transform_8, window_bounds = array<i64: 128, 16>}]} {
    %c0 = arith.constant 0 : index
    %c0_0 = arith.constant 0 : index
    %0 = vector.load %arg1[%c0, %c0_0] : memref<128x8xf32, #tpu.memory_space<vmem>>, vector<128x8xf32>
    %c0_1 = arith.constant 0 : index
    %c0_2 = arith.constant 0 : index
    %1 = vector.load %arg3[%c0_1, %c0_2] : memref<8x16xf32, #tpu.memory_space<vmem>>, vector<8x16xf32>
    %cst = arith.constant dense<0.000000e+00> : vector<128x16xf32>
    %2 = tpu.matmul %0, %1, %cst {dimension_numbers = #tpu.dot_dimension_numbers<[1], [0], [0], [1], [0, 0, 1, 1], [], []>} : vector<128x8xf32>, vector<8x16xf32>, vector<128x16xf32> -> vector<128x16xf32>
    %c0_3 = arith.constant 0 : index
    %c0_4 = arith.constant 0 : index
    %3 = vector.load %arg4[%c0_3, %c0_4] : memref<1x16xf32, #tpu.memory_space<vmem>>, vector<1x16xf32>
    %4 = vector.broadcast %3 : vector<1x16xf32> to vector<128x16xf32>
    %5 = arith.mulf %2, %4 : vector<128x16xf32>
    %c0_5 = arith.constant 0 : index
    %c0_6 = arith.constant 0 : index
    %6 = vector.load %arg5[%c0_5, %c0_6] : memref<1x16xf32, #tpu.memory_space<vmem>>, vector<1x16xf32>
    %7 = vector.broadcast %6 : vector<1x16xf32> to vector<128x16xf32>
    %8 = arith.addf %5, %7 : vector<128x16xf32>
    %c0_7 = arith.constant 0 : index
    %c0_8 = arith.constant 0 : index
    %9 = vector.load %arg2[%c0_7, %c0_8] : memref<128x16xf32, #tpu.memory_space<vmem>>, vector<128x16xf32>
    %c0_9 = arith.constant 0 : index
    %c0_10 = arith.constant 0 : index
    %10 = vector.load %arg8[%c0_9, %c0_10] : memref<1x2xf32, #tpu.memory_space<vmem>>, vector<1x2xf32>
    %c0_11 = arith.constant 0 : index
    %c0_12 = arith.constant 0 : index
    %11 = vector.load %arg6[%c0_11, %c0_12] : memref<2x16xf32, #tpu.memory_space<vmem>>, vector<1x16xf32>
    %12 = vector.broadcast %11 : vector<1x16xf32> to vector<128x16xf32>
    %13 = arith.mulf %8, %12 : vector<128x16xf32>
    %cst_13 = arith.constant dense<0.000000e+00> : vector<128xf32>
    %14 = vector.multi_reduction <add>, %13, %cst_13 [1] : vector<128x16xf32> to vector<128xf32>
    %15 = vector.shape_cast %14 : vector<128xf32> to vector<128x1xf32>
    %c0_14 = arith.constant 0 : index
    %c0_15 = arith.constant 0 : index
    %16 = vector.load %arg7[%c0_14, %c0_15] : memref<2x16xf32, #tpu.memory_space<vmem>>, vector<1x16xf32>
    %17 = vector.broadcast %16 : vector<1x16xf32> to vector<128x16xf32>
    %18 = arith.mulf %9, %17 : vector<128x16xf32>
    %cst_16 = arith.constant dense<0.000000e+00> : vector<128xf32>
    %19 = vector.multi_reduction <add>, %18, %cst_16 [1] : vector<128x16xf32> to vector<128xf32>
    %20 = vector.shape_cast %19 : vector<128xf32> to vector<128x1xf32>
    %21 = arith.addf %15, %20 : vector<128x1xf32>
    %22 = vector.extract_strided_slice %10 {offsets = [0, 0], sizes = [1, 1], strides = [1, 1]} : vector<1x2xf32> to vector<1x1xf32>
    %23 = vector.broadcast %22 : vector<1x1xf32> to vector<128x1xf32>
    %24 = arith.addf %21, %23 : vector<128x1xf32>
    %c1 = arith.constant 1 : index
    %c0_17 = arith.constant 0 : index
    %25 = vector.load %arg6[%c1, %c0_17] : memref<2x16xf32, #tpu.memory_space<vmem>>, vector<1x16xf32>
    %26 = vector.broadcast %25 : vector<1x16xf32> to vector<128x16xf32>
    %27 = arith.mulf %8, %26 : vector<128x16xf32>
    %cst_18 = arith.constant dense<0.000000e+00> : vector<128xf32>
    %28 = vector.multi_reduction <add>, %27, %cst_18 [1] : vector<128x16xf32> to vector<128xf32>
    %29 = vector.shape_cast %28 : vector<128xf32> to vector<128x1xf32>
    %c1_19 = arith.constant 1 : index
    %c0_20 = arith.constant 0 : index
    %30 = vector.load %arg7[%c1_19, %c0_20] : memref<2x16xf32, #tpu.memory_space<vmem>>, vector<1x16xf32>
    %31 = vector.broadcast %30 : vector<1x16xf32> to vector<128x16xf32>
    %32 = arith.mulf %9, %31 : vector<128x16xf32>
    %cst_21 = arith.constant dense<0.000000e+00> : vector<128xf32>
    %33 = vector.multi_reduction <add>, %32, %cst_21 [1] : vector<128x16xf32> to vector<128xf32>
    %34 = vector.shape_cast %33 : vector<128xf32> to vector<128x1xf32>
    %35 = arith.addf %29, %34 : vector<128x1xf32>
    %36 = vector.extract_strided_slice %10 {offsets = [0, 1], sizes = [1, 1], strides = [1, 1]} : vector<1x2xf32> to vector<1x1xf32>
    %37 = vector.broadcast %36 : vector<1x1xf32> to vector<128x1xf32>
    %38 = arith.addf %35, %37 : vector<128x1xf32>
    %39 = arith.negf %24 : vector<128x1xf32>
    %40 = math.exp %39 : vector<128x1xf32>
    %cst_22 = arith.constant 1.000000e+00 : f32
    %41 = vector.broadcast %cst_22 : f32 to vector<128x1xf32>
    %42 = arith.addf %41, %40 : vector<128x1xf32>
    %43 = arith.divf %41, %42 : vector<128x1xf32>
    %44 = arith.negf %38 : vector<128x1xf32>
    %45 = math.exp %44 : vector<128x1xf32>
    %cst_23 = arith.constant 1.000000e+00 : f32
    %46 = vector.broadcast %cst_23 : f32 to vector<128x1xf32>
    %47 = arith.addf %46, %45 : vector<128x1xf32>
    %48 = arith.divf %46, %47 : vector<128x1xf32>
    %49 = vector.broadcast %43 : vector<128x1xf32> to vector<128x16xf32>
    %50 = arith.mulf %8, %49 : vector<128x16xf32>
    %51 = vector.broadcast %48 : vector<128x1xf32> to vector<128x16xf32>
    %52 = arith.mulf %9, %51 : vector<128x16xf32>
    %53 = arith.addf %50, %52 : vector<128x16xf32>
    %c0_24 = arith.constant 0 : index
    %c0_25 = arith.constant 0 : index
    %54 = vector.load %arg9[%c0_24, %c0_25] : memref<128x16xf32, #tpu.memory_space<vmem>>, vector<128x16xf32>
    tpu.vector_store %arg9[%c0_24, %c0_25], %53 {strides = array<i32>} : memref<128x16xf32, #tpu.memory_space<vmem>>, vector<128x16xf32>,
    return
  }
  func.func @transform_0(%arg0: i32) -> (i32, i32) {
    %c0_i32 = arith.constant 0 : i32
    %c0_i32_0 = arith.constant 0 : i32
    return %arg0, %c0_i32 : i32, i32
  }
  func.func @transform_1(%arg0: i32) -> (i32, i32) {
    %c0_i32 = arith.constant 0 : i32
    %c0_i32_0 = arith.constant 0 : i32
    return %arg0, %c0_i32 : i32, i32
  }
  func.func @transform_2(%arg0: i32) -> (i32, i32) {
    %c0_i32 = arith.constant 0 : i32
    %c0_i32_0 = arith.constant 0 : i32
    %c0_i32_1 = arith.constant 0 : i32
    return %c0_i32, %c0_i32_0 : i32, i32
  }
  func.func @transform_3(%arg0: i32) -> (i32, i32) {
    %c0_i32 = arith.constant 0 : i32
    %c0_i32_0 = arith.constant 0 : i32
    %c0_i32_1 = arith.constant 0 : i32
    return %c0_i32, %c0_i32_0 : i32, i32
  }
  func.func @transform_4(%arg0: i32) -> (i32, i32) {
    %c0_i32 = arith.constant 0 : i32
    %c0_i32_0 = arith.constant 0 : i32
    %c0_i32_1 = arith.constant 0 : i32
    return %c0_i32, %c0_i32_0 : i32, i32
  }
  func.func @transform_5(%arg0: i32) -> (i32, i32) {
    %c0_i32 = arith.constant 0 : i32
    %c0_i32_0 = arith.constant 0 : i32
    %c0_i32_1 = arith.constant 0 : i32
    return %c0_i32, %c0_i32_0 : i32, i32
  }
  func.func @transform_6(%arg0: i32) -> (i32, i32) {
    %c0_i32 = arith.constant 0 : i32
    %c0_i32_0 = arith.constant 0 : i32
    %c0_i32_1 = arith.constant 0 : i32
    return %c0_i32, %c0_i32_0 : i32, i32
  }
  func.func @transform_7(%arg0: i32) -> (i32, i32) {
    %c0_i32 = arith.constant 0 : i32
    %c0_i32_0 = arith.constant 0 : i32
    %c0_i32_1 = arith.constant 0 : i32
    return %c0_i32, %c0_i32_0 : i32, i32
  }
  func.func @transform_8(%arg0: i32) -> (i32, i32) {
    %c0_i32 = arith.constant 0 : i32
    %c0_i32_0 = arith.constant 0 : i32
    return %arg0, %c0_i32 : i32, i32
  }
}

</mosaic_0001>

<llo_original>
// kernel: tpu_custom_call.1
$region0: #{tpu_custom_call.1}
  #allocation0 [shape = 'u32[]', space=smem, size = 0x4, offset = 0x4, fixed_abs, tag = 'smem constant byte address 0x4 - core index']
  #allocation1 [shape = 'u32[144,128]{1,0:T(1,128)}', space=vmem, size = 0x12000, scoped, tag = 'internal scratch']
  %s0 = inlined_call_operand.vmem [shape: f32[128,8], index: 0, kind: input, shape index: {}]
  %s1 = inlined_call_operand.vmem [shape: f32[128,16], index: 1, kind: input, shape index: {}]
  %s2 = inlined_call_operand.vmem [shape: f32[8,16], index: 2, kind: input, shape index: {}]
  %s3 = inlined_call_operand.vmem [shape: f32[1,16], index: 3, kind: input, shape index: {}]
  %s4 = inlined_call_operand.vmem [shape: f32[1,16], index: 4, kind: input, shape index: {}]
  %s5 = inlined_call_operand.vmem [shape: f32[2,16], index: 5, kind: input, shape index: {}]
  %s6 = inlined_call_operand.vmem [shape: f32[2,16], index: 6, kind: input, shape index: {}]
  %s7 = inlined_call_operand.vmem [shape: f32[1,2], index: 7, kind: input, shape index: {}]
  %s8 = inlined_call_operand.vmem [shape: f32[128,16], index: 8, kind: output, shape index: {}]
  %s9 = sld [smem:[#allocation0]]
  $region42: #{tpu_custom_call.1} parent=0
    _
  %s11 = ssub.s32 1, %s9
  %s12 = scalar_select 0, %s11, %s9
  // Predicated region
  $region2: #{tpu_custom_call.1} parent=0 // pred_check
    _
  $region3: #{tpu_custom_call.1} parent=0 // pred_check_branch
    %14 = sbr.rel (0) target = $region5
  $region4: #{tpu_custom_call.1} parent=0 // pred_region
    _
  $region5: #{tpu_custom_call.1} parent=0 // pred_fallthru
    _
  // Predicated region
  $region6: #{tpu_custom_call.1} parent=0 // pred_check
    _
  $region7: #{tpu_custom_call.1} parent=0 // pred_check_branch
    %16 = sbr.rel (0) target = $region9
  $region8: #{tpu_custom_call.1} parent=0 // pred_region
    _
  $region9: #{tpu_custom_call.1} parent=0 // pred_fallthru
    _
  // Predicated region
  $region10: #{tpu_custom_call.1} parent=0 // pred_check
    _
  $region11: #{tpu_custom_call.1} parent=0 // pred_check_branch
    %18 = sbr.rel (0) target = $region13
  $region12: #{tpu_custom_call.1} parent=0 // pred_region
    _
  $region13: #{tpu_custom_call.1} parent=0 // pred_fallthru
    _
  // Predicated region
  $region14: #{tpu_custom_call.1} parent=0 // pred_check
    _
  $region15: #{tpu_custom_call.1} parent=0 // pred_check_branch
    %20 = sbr.rel (0) target = $region17
  $region16: #{tpu_custom_call.1} parent=0 // pred_region
    _
  $region17: #{tpu_custom_call.1} parent=0 // pred_fallthru
    _
  // Predicated region
  $region18: #{tpu_custom_call.1} parent=0 // pred_check
    _
  $region19: #{tpu_custom_call.1} parent=0 // pred_check_branch
    %22 = sbr.rel (0) target = $region21
  $region20: #{tpu_custom_call.1} parent=0 // pred_region
    _
  $region21: #{tpu_custom_call.1} parent=0 // pred_fallthru
    _
  // Predicated region
  $region22: #{tpu_custom_call.1} parent=0 // pred_check
    _
  $region23: #{tpu_custom_call.1} parent=0 // pred_check_branch
    %24 = sbr.rel (0) target = $region25
  $region24: #{tpu_custom_call.1} parent=0 // pred_region
    _
  $region25: #{tpu_custom_call.1} parent=0 // pred_fallthru
    _
  // Predicated region
  $region26: #{tpu_custom_call.1} parent=0 // pred_check
    _
  $region27: #{tpu_custom_call.1} parent=0 // pred_check_branch
    %26 = sbr.rel (0) target = $region29
  $region28: #{tpu_custom_call.1} parent=0 // pred_region
    _
  $region29: #{tpu_custom_call.1} parent=0 // pred_fallthru
    _
  // Predicated region
  $region30: #{tpu_custom_call.1} parent=0 // pred_check
    _
  $region31: #{tpu_custom_call.1} parent=0 // pred_check_branch
    %28 = sbr.rel (0) target = $region33
  $region32: #{tpu_custom_call.1} parent=0 // pred_region
    _
  $region33: #{tpu_custom_call.1} parent=0 // pred_fallthru
    _
  %v29 = vld [vmem:[%s0] sm:$0xff]
  %v30 = vld [vmem:[%s0 + $0x8] sm:$0xff]
  %v31 = vld [vmem:[%s0 + $0x10] sm:$0xff]
  %v32 = vld [vmem:[%s0 + $0x18] sm:$0xff]
  %v33 = vld [vmem:[%s0 + $0x20] sm:$0xff]
  %v34 = vld [vmem:[%s0 + $0x28] sm:$0xff]
  %v35 = vld [vmem:[%s0 + $0x30] sm:$0xff]
  %v36 = vld [vmem:[%s0 + $0x38] sm:$0xff]
  %v37 = vld [vmem:[%s0 + $0x40] sm:$0xff]
  %v38 = vld [vmem:[%s0 + $0x48] sm:$0xff]
  %v39 = vld [vmem:[%s0 + $0x50] sm:$0xff]
  %v40 = vld [vmem:[%s0 + $0x58] sm:$0xff]
  %v41 = vld [vmem:[%s0 + $0x60] sm:$0xff]
  %v42 = vld [vmem:[%s0 + $0x68] sm:$0xff]
  %v43 = vld [vmem:[%s0 + $0x70] sm:$0xff]
  %v44 = vld [vmem:[%s0 + $0x78] sm:$0xff]
  %v45 = vld [vmem:[%s2] sm:$0xff]
  %vm46 = vcmask 64512
  %v48 = vsel %vm46, %v29, 0
  %v51 = vsel %vm46, %v30, 0
  %v54 = vsel %vm46, %v31, 0
  %v57 = vsel %vm46, %v32, 0
  %v60 = vsel %vm46, %v33, 0
  %v63 = vsel %vm46, %v34, 0
  %v66 = vsel %vm46, %v35, 0
  %v69 = vsel %vm46, %v36, 0
  %v72 = vsel %vm46, %v37, 0
  %v75 = vsel %vm46, %v38, 0
  %v78 = vsel %vm46, %v39, 0
  %v81 = vsel %vm46, %v40, 0
  %v84 = vsel %vm46, %v41, 0
  %v87 = vsel %vm46, %v42, 0
  %v90 = vsel %vm46, %v43, 0
  %v93 = vsel %vm46, %v44, 0
  %95 = vmatprep.subr.mxu0 0.0
  %96 = vmatpush1.msra.mxu0 %v45
  %97 = vmatprep.subr.mxu0 0.0
  %98 = vmatpush1.msra.mxu0 0.0
  %99 = vmatprep.subr.mxu0 0.0
  %100 = vmatpush1.msra.mxu0 0.0
  %101 = vmatprep.subr.mxu0 0.0
  %102 = vmatpush1.msra.mxu0 0.0
  %103 = vmatprep.subr.mxu0 0.0
  %104 = vmatpush1.msra.mxu0 0.0
  %105 = vmatprep.subr.mxu0 0.0
  %106 = vmatpush1.msra.mxu0 0.0
  %107 = vmatprep.subr.mxu0 0.0
  %108 = vmatpush1.msra.mxu0 0.0
  %109 = vmatprep.subr.mxu0 0.0
  %110 = vmatpush1.msra.mxu0 0.0
  %111 = vmatprep.subr.mxu0 0.0
  %112 = vmatpush1.msra.mxu0 0.0
  %113 = vmatprep.subr.mxu0 0.0
  %114 = vmatpush1.msra.mxu0 0.0
  %115 = vmatprep.subr.mxu0 0.0
  %116 = vmatpush1.msra.mxu0 0.0
  %117 = vmatprep.subr.mxu0 0.0
  %118 = vmatpush1.msra.mxu0 0.0
  %119 = vmatprep.subr.mxu0 0.0
  %120 = vmatpush1.msra.mxu0 0.0
  %121 = vmatprep.subr.mxu0 0.0
  %122 = vmatpush1.msra.mxu0 0.0
  %123 = vmatprep.subr.mxu0 0.0
  %124 = vmatpush1.msra.mxu0 0.0
  %125 = vmatprep.subr.mxu0 0.0
  %126 = vmatpush1.msra.mxu0 0.0
  %127 = vmatprep.subr.mxu0 0.0
  %128 = vmatpush1.msra.mxu0 0.0
  %129 = vmatprep.subr.mxu0 0.0
  %130 = vmatpush1.msra.mxu0 0.0
  %131 = vmatprep.subr.mxu0 0.0
  %132 = vmatpush1.msra.mxu0 0.0
  %133 = vmatprep.subr.mxu0 0.0
  %134 = vmatpush1.msra.mxu0 0.0
  %135 = vmatprep.subr.mxu0 0.0
  %136 = vmatpush1.msra.mxu0 0.0
  %137 = vmatprep.subr.mxu0 0.0
  %138 = vmatpush1.msra.mxu0 0.0
  %139 = vmatprep.subr.mxu0 0.0
  %140 = vmatpush1.msra.mxu0 0.0
  %141 = vmatprep.subr.mxu0 0.0
  %142 = vmatpush1.msra.mxu0 0.0
  %143 = vmatprep.subr.mxu0 0.0
  %144 = vmatpush1.msra.mxu0 0.0
  %145 = vmatprep.subr.mxu0 0.0
  %146 = vmatpush1.msra.mxu0 0.0
  %147 = vmatprep.subr.mxu0 0.0
  %148 = vmatpush1.msra.mxu0 0.0
  %149 = vmatprep.subr.mxu0 0.0
  %150 = vmatpush1.msra.mxu0 0.0
  %151 = vmatprep.subr.mxu0 0.0
  %152 = vmatpush1.msra.mxu0 0.0
  %153 = vmatprep.subr.mxu0 0.0
  %154 = vmatpush1.msra.mxu0 0.0
  %155 = vmatprep.subr.mxu0 0.0
  %156 = vmatpush1.msra.mxu0 0.0
  %157 = vmatprep.subr.mxu0 0.0
  %158 = vmatpush1.msra.mxu0 0.0
  %159 = vmatprep.mubr.f32.mxu0 0.0
  %160 = vmatmul.mubr.f32.gmra.mrb[0].mxu0 %v48
  %v161 = vpop.f32.mrb[0].mxu0
  %v162 = vadd.f32 0.0, %v161
  %v163 = vpop.f32.mrb[0].mxu0
  %164 = vmatprep.mubr.f32.mxu0 0.0
  %165 = vmatmul.mubr.f32.gmra.mrb[0].mxu0 %v51
  %v166 = vpop.f32.mrb[0].mxu0
  %v167 = vadd.f32 0.0, %v166
  %v168 = vpop.f32.mrb[0].mxu0
  %169 = vmatprep.mubr.f32.mxu0 0.0
  %170 = vmatmul.mubr.f32.gmra.mrb[0].mxu0 %v54
  %v171 = vpop.f32.mrb[0].mxu0
  %v172 = vadd.f32 0.0, %v171
  %v173 = vpop.f32.mrb[0].mxu0
  %174 = vmatprep.mubr.f32.mxu0 0.0
  %175 = vmatmul.mubr.f32.gmra.mrb[0].mxu0 %v57
  %v176 = vpop.f32.mrb[0].mxu0
  %v177 = vadd.f32 0.0, %v176
  %v178 = vpop.f32.mrb[0].mxu0
  %179 = vmatprep.mubr.f32.mxu0 0.0
  %180 = vmatmul.mubr.f32.gmra.mrb[0].mxu0 %v60
  %v181 = vpop.f32.mrb[0].mxu0
  %v182 = vadd.f32 0.0, %v181
  %v183 = vpop.f32.mrb[0].mxu0
  %184 = vmatprep.mubr.f32.mxu0 0.0
  %185 = vmatmul.mubr.f32.gmra.mrb[0].mxu0 %v63
  %v186 = vpop.f32.mrb[0].mxu0
  %v187 = vadd.f32 0.0, %v186
  %v188 = vpop.f32.mrb[0].mxu0
  %189 = vmatprep.mubr.f32.mxu0 0.0
  %190 = vmatmul.mubr.f32.gmra.mrb[0].mxu0 %v66
  %v191 = vpop.f32.mrb[0].mxu0
  %v192 = vadd.f32 0.0, %v191
  %v193 = vpop.f32.mrb[0].mxu0
  %194 = vmatprep.mubr.f32.mxu0 0.0
  %195 = vmatmul.mubr.f32.gmra.mrb[0].mxu0 %v69
  %v196 = vpop.f32.mrb[0].mxu0
  %v197 = vadd.f32 0.0, %v196
  %v198 = vpop.f32.mrb[0].mxu0
  %199 = vmatprep.mubr.f32.mxu0 0.0
  %200 = vmatmul.mubr.f32.gmra.mrb[0].mxu0 %v72
  %v201 = vpop.f32.mrb[0].mxu0
  %v202 = vadd.f32 0.0, %v201
  %v203 = vpop.f32.mrb[0].mxu0
  %204 = vmatprep.mubr.f32.mxu0 0.0
  %205 = vmatmul.mubr.f32.gmra.mrb[0].mxu0 %v75
  %v206 = vpop.f32.mrb[0].mxu0
  %v207 = vadd.f32 0.0, %v206
  %v208 = vpop.f32.mrb[0].mxu0
  %209 = vmatprep.mubr.f32.mxu0 0.0
  %210 = vmatmul.mubr.f32.gmra.mrb[0].mxu0 %v78
  %v211 = vpop.f32.mrb[0].mxu0
  %v212 = vadd.f32 0.0, %v211
  %v213 = vpop.f32.mrb[0].mxu0
  %214 = vmatprep.mubr.f32.mxu0 0.0
  %215 = vmatmul.mubr.f32.gmra.mrb[0].mxu0 %v81
  %v216 = vpop.f32.mrb[0].mxu0
  %v217 = vadd.f32 0.0, %v216
  %v218 = vpop.f32.mrb[0].mxu0
  %219 = vmatprep.mubr.f32.mxu0 0.0
  %220 = vmatmul.mubr.f32.gmra.mrb[0].mxu0 %v84
  %v221 = vpop.f32.mrb[0].mxu0
  %v222 = vadd.f32 0.0, %v221
  %v223 = vpop.f32.mrb[0].mxu0
  %224 = vmatprep.mubr.f32.mxu0 0.0
  %225 = vmatmul.mubr.f32.gmra.mrb[0].mxu0 %v87
  %v226 = vpop.f32.mrb[0].mxu0
  %v227 = vadd.f32 0.0, %v226
  %v228 = vpop.f32.mrb[0].mxu0
  %229 = vmatprep.mubr.f32.mxu0 0.0
  %230 = vmatmul.mubr.f32.gmra.mrb[0].mxu0 %v90
  %v231 = vpop.f32.mrb[0].mxu0
  %v232 = vadd.f32 0.0, %v231
  %v233 = vpop.f32.mrb[0].mxu0
  %234 = vmatprep.mubr.f32.mxu0 0.0
  %235 = vmatmul.mubr.f32.gmra.mrb[0].mxu0 %v93
  %v236 = vpop.f32.mrb[0].mxu0
  %v237 = vadd.f32 0.0, %v236
  %v238 = vpop.f32.mrb[0].mxu0
  %239 = vdwg.mxu0
  %v240 = vld [vmem:[%s3] sm:$0x1]
  %v242 = vlaneseq
  %v243 = vshrl.u32 %v242, 7
  %v244 = vsub.s32 0, %v243
  %v245 = vrot.slane %v240, %v244
  %v247 = vmul.f32 %v162, %v245
  %v248 = vmul.f32 %v167, %v245
  %v249 = vmul.f32 %v172, %v245
  %v250 = vmul.f32 %v177, %v245
  %v251 = vmul.f32 %v182, %v245
  %v252 = vmul.f32 %v187, %v245
  %v253 = vmul.f32 %v192, %v245
  %v254 = vmul.f32 %v197, %v245
  %v255 = vmul.f32 %v202, %v245
  %v256 = vmul.f32 %v207, %v245
  %v257 = vmul.f32 %v212, %v245
  %v258 = vmul.f32 %v217, %v245
  %v259 = vmul.f32 %v222, %v245
  %v260 = vmul.f32 %v227, %v245
  %v261 = vmul.f32 %v232, %v245
  %v262 = vmul.f32 %v237, %v245
  %v263 = vld [vmem:[%s4] sm:$0x1]
  %v265 = vlaneseq
  %v266 = vshrl.u32 %v265, 7
  %v267 = vsub.s32 0, %v266
  %v268 = vrot.slane %v263, %v267
  %v270 = vadd.f32 %v247, %v268
  %v271 = vadd.f32 %v248, %v268
  %v272 = vadd.f32 %v249, %v268
  %v273 = vadd.f32 %v250, %v268
  %v274 = vadd.f32 %v251, %v268
  %v275 = vadd.f32 %v252, %v268
  %v276 = vadd.f32 %v253, %v268
  %v277 = vadd.f32 %v254, %v268
  %v278 = vadd.f32 %v255, %v268
  %v279 = vadd.f32 %v256, %v268
  %v280 = vadd.f32 %v257, %v268
  %v281 = vadd.f32 %v258, %v268
  %v282 = vadd.f32 %v259, %v268
  %v283 = vadd.f32 %v260, %v268
  %v284 = vadd.f32 %v261, %v268
  %v285 = vadd.f32 %v262, %v268
  %v286 = vld [vmem:[%s1] sm:$0xff]
  %v287 = vld [vmem:[%s1 + $0x8] sm:$0xff]
  %v288 = vld [vmem:[%s1 + $0x10] sm:$0xff]
  %v289 = vld [vmem:[%s1 + $0x18] sm:$0xff]
  %v290 = vld [vmem:[%s1 + $0x20] sm:$0xff]
  %v291 = vld [vmem:[%s1 + $0x28] sm:$0xff]
  %v292 = vld [vmem:[%s1 + $0x30] sm:$0xff]
  %v293 = vld [vmem:[%s1 + $0x38] sm:$0xff]
  %v294 = vld [vmem:[%s1 + $0x40] sm:$0xff]
  %v295 = vld [vmem:[%s1 + $0x48] sm:$0xff]
  %v296 = vld [vmem:[%s1 + $0x50] sm:$0xff]
  %v297 = vld [vmem:[%s1 + $0x58] sm:$0xff]
  %v298 = vld [vmem:[%s1 + $0x60] sm:$0xff]
  %v299 = vld [vmem:[%s1 + $0x68] sm:$0xff]
  %v300 = vld [vmem:[%s1 + $0x70] sm:$0xff]
  %v301 = vld [vmem:[%s1 + $0x78] sm:$0xff]
  %v302 = vld [vmem:[%s7] sm:$0x1]
  %v303 = vld [vmem:[%s5] sm:$0x1]
  %v304 = vlaneseq
  %v305 = vshrl.u32 %v304, 7
  %v306 = vsub.s32 0, %v305
  %v307 = vrot.slane %v303, %v306
  %v308 = vmul.f32 %v270, %v307
  %v309 = vmul.f32 %v271, %v307
  %v310 = vmul.f32 %v272, %v307
  %v311 = vmul.f32 %v273, %v307
  %v312 = vmul.f32 %v274, %v307
  %v313 = vmul.f32 %v275, %v307
  %v314 = vmul.f32 %v276, %v307
  %v315 = vmul.f32 %v277, %v307
  %v316 = vmul.f32 %v278, %v307
  %v317 = vmul.f32 %v279, %v307
  %v318 = vmul.f32 %v280, %v307
  %v319 = vmul.f32 %v281, %v307
  %v320 = vmul.f32 %v282, %v307
  %v321 = vmul.f32 %v283, %v307
  %v322 = vmul.f32 %v284, %v307
  %v323 = vmul.f32 %v285, %v307
  %vm324 = vcmask 130048
  %v325 = vsel %vm324, %v308, 0.0
  %326 = vadd.xlane.f32.xlu0 %v325
  %v327 = vpop.xlane.xlu0 %326
  %v328 = vsel %vm324, %v309, 0.0
  %329 = vadd.xlane.f32.xlu0 %v328
  %v330 = vpop.xlane.xlu0 %329
  %v331 = vsel %vm324, %v310, 0.0
  %332 = vadd.xlane.f32.xlu0 %v331
  %v333 = vpop.xlane.xlu0 %332
  %v334 = vsel %vm324, %v311, 0.0
  %335 = vadd.xlane.f32.xlu0 %v334
  %v336 = vpop.xlane.xlu0 %335
  %v337 = vsel %vm324, %v312, 0.0
  %338 = vadd.xlane.f32.xlu0 %v337
  %v339 = vpop.xlane.xlu0 %338
  %v340 = vsel %vm324, %v313, 0.0
  %341 = vadd.xlane.f32.xlu0 %v340
  %v342 = vpop.xlane.xlu0 %341
  %v343 = vsel %vm324, %v314, 0.0
  %344 = vadd.xlane.f32.xlu0 %v343
  %v345 = vpop.xlane.xlu0 %344
  %v346 = vsel %vm324, %v315, 0.0
  %347 = vadd.xlane.f32.xlu0 %v346
  %v348 = vpop.xlane.xlu0 %347
  %v349 = vsel %vm324, %v316, 0.0
  %350 = vadd.xlane.f32.xlu0 %v349
  %v351 = vpop.xlane.xlu0 %350
  %v352 = vsel %vm324, %v317, 0.0
  %353 = vadd.xlane.f32.xlu0 %v352
  %v354 = vpop.xlane.xlu0 %353
  %v355 = vsel %vm324, %v318, 0.0
  %356 = vadd.xlane.f32.xlu0 %v355
  %v357 = vpop.xlane.xlu0 %356
  %v358 = vsel %vm324, %v319, 0.0
  %359 = vadd.xlane.f32.xlu0 %v358
  %v360 = vpop.xlane.xlu0 %359
  %v361 = vsel %vm324, %v320, 0.0
  %362 = vadd.xlane.f32.xlu0 %v361
  %v363 = vpop.xlane.xlu0 %362
  %v364 = vsel %vm324, %v321, 0.0
  %365 = vadd.xlane.f32.xlu0 %v364
  %v366 = vpop.xlane.xlu0 %365
  %v367 = vsel %vm324, %v322, 0.0
  %368 = vadd.xlane.f32.xlu0 %v367
  %v369 = vpop.xlane.xlu0 %368
  %v370 = vsel %vm324, %v323, 0.0
  %371 = vadd.xlane.f32.xlu0 %v370
  %v372 = vpop.xlane.xlu0 %371
  %v373 = vld [vmem:[%s6] sm:$0x1]
  %v374 = vlaneseq
  %v375 = vshrl.u32 %v374, 7
  %v376 = vsub.s32 0, %v375
  %v377 = vrot.slane %v373, %v376
  %v378 = vmul.f32 %v286, %v377
  %v379 = vmul.f32 %v287, %v377
  %v380 = vmul.f32 %v288, %v377
  %v381 = vmul.f32 %v289, %v377
  %v382 = vmul.f32 %v290, %v377
  %v383 = vmul.f32 %v291, %v377
  %v384 = vmul.f32 %v292, %v377
  %v385 = vmul.f32 %v293, %v377
  %v386 = vmul.f32 %v294, %v377
  %v387 = vmul.f32 %v295, %v377
  %v388 = vmul.f32 %v296, %v377
  %v389 = vmul.f32 %v297, %v377
  %v390 = vmul.f32 %v298, %v377
  %v391 = vmul.f32 %v299, %v377
  %v392 = vmul.f32 %v300, %v377
  %v393 = vmul.f32 %v301, %v377
  %v394 = vsel %vm324, %v378, 0.0
  %395 = vadd.xlane.f32.xlu0 %v394
  %v396 = vpop.xlane.xlu0 %395
  %v397 = vsel %vm324, %v379, 0.0
  %398 = vadd.xlane.f32.xlu0 %v397
  %v399 = vpop.xlane.xlu0 %398
  %v400 = vsel %vm324, %v380, 0.0
  %401 = vadd.xlane.f32.xlu0 %v400
  %v402 = vpop.xlane.xlu0 %401
  %v403 = vsel %vm324, %v381, 0.0
  %404 = vadd.xlane.f32.xlu0 %v403
  %v405 = vpop.xlane.xlu0 %404
  %v406 = vsel %vm324, %v382, 0.0
  %407 = vadd.xlane.f32.xlu0 %v406
  %v408 = vpop.xlane.xlu0 %407
  %v409 = vsel %vm324, %v383, 0.0
  %410 = vadd.xlane.f32.xlu0 %v409
  %v411 = vpop.xlane.xlu0 %410
  %v412 = vsel %vm324, %v384, 0.0
  %413 = vadd.xlane.f32.xlu0 %v412
  %v414 = vpop.xlane.xlu0 %413
  %v415 = vsel %vm324, %v385, 0.0
  %416 = vadd.xlane.f32.xlu0 %v415
  %v417 = vpop.xlane.xlu0 %416
  %v418 = vsel %vm324, %v386, 0.0
  %419 = vadd.xlane.f32.xlu0 %v418
  %v420 = vpop.xlane.xlu0 %419
  %v421 = vsel %vm324, %v387, 0.0
  %422 = vadd.xlane.f32.xlu0 %v421
  %v423 = vpop.xlane.xlu0 %422
  %v424 = vsel %vm324, %v388, 0.0
  %425 = vadd.xlane.f32.xlu0 %v424
  %v426 = vpop.xlane.xlu0 %425
  %v427 = vsel %vm324, %v389, 0.0
  %428 = vadd.xlane.f32.xlu0 %v427
  %v429 = vpop.xlane.xlu0 %428
  %v430 = vsel %vm324, %v390, 0.0
  %431 = vadd.xlane.f32.xlu0 %v430
  %v432 = vpop.xlane.xlu0 %431
  %v433 = vsel %vm324, %v391, 0.0
  %434 = vadd.xlane.f32.xlu0 %v433
  %v435 = vpop.xlane.xlu0 %434
  %v436 = vsel %vm324, %v392, 0.0
  %437 = vadd.xlane.f32.xlu0 %v436
  %v438 = vpop.xlane.xlu0 %437
  %v439 = vsel %vm324, %v393, 0.0
  %440 = vadd.xlane.f32.xlu0 %v439
  %v441 = vpop.xlane.xlu0 %440
  %v442 = vadd.f32 %v327, %v396
  %v443 = vadd.f32 %v330, %v399
  %v444 = vadd.f32 %v333, %v402
  %v445 = vadd.f32 %v336, %v405
  %v446 = vadd.f32 %v339, %v408
  %v447 = vadd.f32 %v342, %v411
  %v448 = vadd.f32 %v345, %v414
  %v449 = vadd.f32 %v348, %v417
  %v450 = vadd.f32 %v351, %v420
  %v451 = vadd.f32 %v354, %v423
  %v452 = vadd.f32 %v357, %v426
  %v453 = vadd.f32 %v360, %v429
  %v454 = vadd.f32 %v363, %v432
  %v455 = vadd.f32 %v366, %v435
  %v456 = vadd.f32 %v369, %v438
  %v457 = vadd.f32 %v372, %v441
  %v459 = vlaneseq
  %v460 = vshrl.u32 %v459, 7
  %v461 = vsub.s32 0, %v460
  %v462 = vrot.slane %v302, %v461
  %v464 = vadd.f32 %v442, %v462
  %v465 = vadd.f32 %v443, %v462
  %v466 = vadd.f32 %v444, %v462
  %v467 = vadd.f32 %v445, %v462
  %v468 = vadd.f32 %v446, %v462
  %v469 = vadd.f32 %v447, %v462
  %v470 = vadd.f32 %v448, %v462
  %v471 = vadd.f32 %v449, %v462
  %v472 = vadd.f32 %v450, %v462
  %v473 = vadd.f32 %v451, %v462
  %v474 = vadd.f32 %v452, %v462
  %v475 = vadd.f32 %v453, %v462
  %v476 = vadd.f32 %v454, %v462
  %v477 = vadd.f32 %v455, %v462
  %v478 = vadd.f32 %v456, %v462
  %v479 = vadd.f32 %v457, %v462
  %v480 = vld [vmem:[%s5 + $0x1] sm:$0x1]
  %v481 = vlaneseq
  %v482 = vshrl.u32 %v481, 7
  %v483 = vsub.s32 0, %v482
  %v484 = vrot.slane %v480, %v483
  %v485 = vmul.f32 %v270, %v484
  %v486 = vmul.f32 %v271, %v484
  %v487 = vmul.f32 %v272, %v484
  %v488 = vmul.f32 %v273, %v484
  %v489 = vmul.f32 %v274, %v484
  %v490 = vmul.f32 %v275, %v484
  %v491 = vmul.f32 %v276, %v484
  %v492 = vmul.f32 %v277, %v484
  %v493 = vmul.f32 %v278, %v484
  %v494 = vmul.f32 %v279, %v484
  %v495 = vmul.f32 %v280, %v484
  %v496 = vmul.f32 %v281, %v484
  %v497 = vmul.f32 %v282, %v484
  %v498 = vmul.f32 %v283, %v484
  %v499 = vmul.f32 %v284, %v484
  %v500 = vmul.f32 %v285, %v484
  %v501 = vsel %vm324, %v485, 0.0
  %502 = vadd.xlane.f32.xlu0 %v501
  %v503 = vpop.xlane.xlu0 %502
  %v504 = vsel %vm324, %v486, 0.0
  %505 = vadd.xlane.f32.xlu0 %v504
  %v506 = vpop.xlane.xlu0 %505
  %v507 = vsel %vm324, %v487, 0.0
  %508 = vadd.xlane.f32.xlu0 %v507
  %v509 = vpop.xlane.xlu0 %508
  %v510 = vsel %vm324, %v488, 0.0
  %511 = vadd.xlane.f32.xlu0 %v510
  %v512 = vpop.xlane.xlu0 %511
  %v513 = vsel %vm324, %v489, 0.0
  %514 = vadd.xlane.f32.xlu0 %v513
  %v515 = vpop.xlane.xlu0 %514
  %v516 = vsel %vm324, %v490, 0.0
  %517 = vadd.xlane.f32.xlu0 %v516
  %v518 = vpop.xlane.xlu0 %517
  %v519 = vsel %vm324, %v491, 0.0
  %520 = vadd.xlane.f32.xlu0 %v519
  %v521 = vpop.xlane.xlu0 %520
  %v522 = vsel %vm324, %v492, 0.0
  %523 = vadd.xlane.f32.xlu0 %v522
  %v524 = vpop.xlane.xlu0 %523
  %v525 = vsel %vm324, %v493, 0.0
  %526 = vadd.xlane.f32.xlu0 %v525
  %v527 = vpop.xlane.xlu0 %526
  %v528 = vsel %vm324, %v494, 0.0
  %529 = vadd.xlane.f32.xlu0 %v528
  %v530 = vpop.xlane.xlu0 %529
  %v531 = vsel %vm324, %v495, 0.0
  %532 = vadd.xlane.f32.xlu0 %v531
  %v533 = vpop.xlane.xlu0 %532
  %v534 = vsel %vm324, %v496, 0.0
  %535 = vadd.xlane.f32.xlu0 %v534
  %v536 = vpop.xlane.xlu0 %535
  %v537 = vsel %vm324, %v497, 0.0
  %538 = vadd.xlane.f32.xlu0 %v537
  %v539 = vpop.xlane.xlu0 %538
  %v540 = vsel %vm324, %v498, 0.0
  %541 = vadd.xlane.f32.xlu0 %v540
  %v542 = vpop.xlane.xlu0 %541
  %v543 = vsel %vm324, %v499, 0.0
  %544 = vadd.xlane.f32.xlu0 %v543
  %v545 = vpop.xlane.xlu0 %544
  %v546 = vsel %vm324, %v500, 0.0
  %547 = vadd.xlane.f32.xlu0 %v546
  %v548 = vpop.xlane.xlu0 %547
  %v549 = vld [vmem:[%s6 + $0x1] sm:$0x1]
  %v550 = vlaneseq
  %v551 = vshrl.u32 %v550, 7
  %v552 = vsub.s32 0, %v551
  %v553 = vrot.slane %v549, %v552
  %v554 = vmul.f32 %v286, %v553
  %v555 = vmul.f32 %v287, %v553
  %v556 = vmul.f32 %v288, %v553
  %v557 = vmul.f32 %v289, %v553
  %v558 = vmul.f32 %v290, %v553
  %v559 = vmul.f32 %v291, %v553
  %v560 = vmul.f32 %v292, %v553
  %v561 = vmul.f32 %v293, %v553
  %v562 = vmul.f32 %v294, %v553
  %v563 = vmul.f32 %v295, %v553
  %v564 = vmul.f32 %v296, %v553
  %v565 = vmul.f32 %v297, %v553
  %v566 = vmul.f32 %v298, %v553
  %v567 = vmul.f32 %v299, %v553
  %v568 = vmul.f32 %v300, %v553
  %v569 = vmul.f32 %v301, %v553
  %v570 = vsel %vm324, %v554, 0.0
  %571 = vadd.xlane.f32.xlu0 %v570
  %v572 = vpop.xlane.xlu0 %571
  %v573 = vsel %vm324, %v555, 0.0
  %574 = vadd.xlane.f32.xlu0 %v573
  %v575 = vpop.xlane.xlu0 %574
  %v576 = vsel %vm324, %v556, 0.0
  %577 = vadd.xlane.f32.xlu0 %v576
  %v578 = vpop.xlane.xlu0 %577
  %v579 = vsel %vm324, %v557, 0.0
  %580 = vadd.xlane.f32.xlu0 %v579
  %v581 = vpop.xlane.xlu0 %580
  %v582 = vsel %vm324, %v558, 0.0
  %583 = vadd.xlane.f32.xlu0 %v582
  %v584 = vpop.xlane.xlu0 %583
  %v585 = vsel %vm324, %v559, 0.0
  %586 = vadd.xlane.f32.xlu0 %v585
  %v587 = vpop.xlane.xlu0 %586
  %v588 = vsel %vm324, %v560, 0.0
  %589 = vadd.xlane.f32.xlu0 %v588
  %v590 = vpop.xlane.xlu0 %589
  %v591 = vsel %vm324, %v561, 0.0
  %592 = vadd.xlane.f32.xlu0 %v591
  %v593 = vpop.xlane.xlu0 %592
  %v594 = vsel %vm324, %v562, 0.0
  %595 = vadd.xlane.f32.xlu0 %v594
  %v596 = vpop.xlane.xlu0 %595
  %v597 = vsel %vm324, %v563, 0.0
  %598 = vadd.xlane.f32.xlu0 %v597
  %v599 = vpop.xlane.xlu0 %598
  %v600 = vsel %vm324, %v564, 0.0
  %601 = vadd.xlane.f32.xlu0 %v600
  %v602 = vpop.xlane.xlu0 %601
  %v603 = vsel %vm324, %v565, 0.0
  %604 = vadd.xlane.f32.xlu0 %v603
  %v605 = vpop.xlane.xlu0 %604
  %v606 = vsel %vm324, %v566, 0.0
  %607 = vadd.xlane.f32.xlu0 %v606
  %v608 = vpop.xlane.xlu0 %607
  %v609 = vsel %vm324, %v567, 0.0
  %610 = vadd.xlane.f32.xlu0 %v609
  %v611 = vpop.xlane.xlu0 %610
  %v612 = vsel %vm324, %v568, 0.0
  %613 = vadd.xlane.f32.xlu0 %v612
  %v614 = vpop.xlane.xlu0 %613
  %v615 = vsel %vm324, %v569, 0.0
  %616 = vadd.xlane.f32.xlu0 %v615
  %v617 = vpop.xlane.xlu0 %616
  %v618 = vadd.f32 %v503, %v572
  %v619 = vadd.f32 %v506, %v575
  %v620 = vadd.f32 %v509, %v578
  %v621 = vadd.f32 %v512, %v581
  %v622 = vadd.f32 %v515, %v584
  %v623 = vadd.f32 %v518, %v587
  %v624 = vadd.f32 %v521, %v590
  %v625 = vadd.f32 %v524, %v593
  %v626 = vadd.f32 %v527, %v596
  %v627 = vadd.f32 %v530, %v599
  %v628 = vadd.f32 %v533, %v602
  %v629 = vadd.f32 %v536, %v605
  %v630 = vadd.f32 %v539, %v608
  %v631 = vadd.f32 %v542, %v611
  %v632 = vadd.f32 %v545, %v614
  %v633 = vadd.f32 %v548, %v617
  %v634 = vadd.f32 %v618, %v462
  %v635 = vadd.f32 %v619, %v462
  %v636 = vadd.f32 %v620, %v462
  %v637 = vadd.f32 %v621, %v462
  %v638 = vadd.f32 %v622, %v462
  %v639 = vadd.f32 %v623, %v462
  %v640 = vadd.f32 %v624, %v462
  %v641 = vadd.f32 %v625, %v462
  %v642 = vadd.f32 %v626, %v462
  %v643 = vadd.f32 %v627, %v462
  %v644 = vadd.f32 %v628, %v462
  %v645 = vadd.f32 %v629, %v462
  %v646 = vadd.f32 %v630, %v462
  %v647 = vadd.f32 %v631, %v462
  %v648 = vadd.f32 %v632, %v462
  %v649 = vadd.f32 %v633, %v462
  %v650 = vxor.u32 %v464, 2147483648
  %v651 = vxor.u32 %v465, 2147483648
  %v652 = vxor.u32 %v466, 2147483648
  %v653 = vxor.u32 %v467, 2147483648
  %v654 = vxor.u32 %v468, 2147483648
  %v655 = vxor.u32 %v469, 2147483648
  %v656 = vxor.u32 %v470, 2147483648
  %v657 = vxor.u32 %v471, 2147483648
  %v658 = vxor.u32 %v472, 2147483648
  %v659 = vxor.u32 %v473, 2147483648
  %v660 = vxor.u32 %v474, 2147483648
  %v661 = vxor.u32 %v475, 2147483648
  %v662 = vxor.u32 %v476, 2147483648
  %v663 = vxor.u32 %v477, 2147483648
  %v664 = vxor.u32 %v478, 2147483648
  %v665 = vxor.u32 %v479, 2147483648
  %v666 = vmul.f32 %v650, 1.442695
  %v667 = vpow.pop %v666
  %v668 = vmul.f32 %v651, 1.442695
  %v669 = vpow.pop %v668
  %v670 = vmul.f32 %v652, 1.442695
  %v671 = vpow.pop %v670
  %v672 = vmul.f32 %v653, 1.442695
  %v673 = vpow.pop %v672
  %v674 = vmul.f32 %v654, 1.442695
  %v675 = vpow.pop %v674
  %v676 = vmul.f32 %v655, 1.442695
  %v677 = vpow.pop %v676
  %v678 = vmul.f32 %v656, 1.442695
  %v679 = vpow.pop %v678
  %v680 = vmul.f32 %v657, 1.442695
  %v681 = vpow.pop %v680
  %v682 = vmul.f32 %v658, 1.442695
  %v683 = vpow.pop %v682
  %v684 = vmul.f32 %v659, 1.442695
  %v685 = vpow.pop %v684
  %v686 = vmul.f32 %v660, 1.442695
  %v687 = vpow.pop %v686
  %v688 = vmul.f32 %v661, 1.442695
  %v689 = vpow.pop %v688
  %v690 = vmul.f32 %v662, 1.442695
  %v691 = vpow.pop %v690
  %v692 = vmul.f32 %v663, 1.442695
  %v693 = vpow.pop %v692
  %v694 = vmul.f32 %v664, 1.442695
  %v695 = vpow.pop %v694
  %v696 = vmul.f32 %v665, 1.442695
  %v697 = vpow.pop %v696
  %v698 = vadd.f32 %v667, 1.0
  %v699 = vadd.f32 %v669, 1.0
  %v700 = vadd.f32 %v671, 1.0
  %v701 = vadd.f32 %v673, 1.0
  %v702 = vadd.f32 %v675, 1.0
  %v703 = vadd.f32 %v677, 1.0
  %v704 = vadd.f32 %v679, 1.0
  %v705 = vadd.f32 %v681, 1.0
  %v706 = vadd.f32 %v683, 1.0
  %v707 = vadd.f32 %v685, 1.0
  %v708 = vadd.f32 %v687, 1.0
  %v709 = vadd.f32 %v689, 1.0
  %v710 = vadd.f32 %v691, 1.0
  %v711 = vadd.f32 %v693, 1.0
  %v712 = vadd.f32 %v695, 1.0
  %v713 = vadd.f32 %v697, 1.0
  %v714 = vrcp.pop %v698
  %v715 = vmul.f32 1.0, %v714
  %v716 = vrcp.pop %v699
  %v717 = vmul.f32 1.0, %v716
  %v718 = vrcp.pop %v700
  %v719 = vmul.f32 1.0, %v718
  %v720 = vrcp.pop %v701
  %v721 = vmul.f32 1.0, %v720
  %v722 = vrcp.pop %v702
  %v723 = vmul.f32 1.0, %v722
  %v724 = vrcp.pop %v703
  %v725 = vmul.f32 1.0, %v724
  %v726 = vrcp.pop %v704
  %v727 = vmul.f32 1.0, %v726
  %v728 = vrcp.pop %v705
  %v729 = vmul.f32 1.0, %v728
  %v730 = vrcp.pop %v706
  %v731 = vmul.f32 1.0, %v730
  %v732 = vrcp.pop %v707
  %v733 = vmul.f32 1.0, %v732
  %v734 = vrcp.pop %v708
  %v735 = vmul.f32 1.0, %v734
  %v736 = vrcp.pop %v709
  %v737 = vmul.f32 1.0, %v736
  %v738 = vrcp.pop %v710
  %v739 = vmul.f32 1.0, %v738
  %v740 = vrcp.pop %v711
  %v741 = vmul.f32 1.0, %v740
  %v742 = vrcp.pop %v712
  %v743 = vmul.f32 1.0, %v742
  %v744 = vrcp.pop %v713
  %v745 = vmul.f32 1.0, %v744
  %v746 = vxor.u32 %v634, 2147483648
  %v747 = vxor.u32 %v635, 2147483648
  %v748 = vxor.u32 %v636, 2147483648
  %v749 = vxor.u32 %v637, 2147483648
  %v750 = vxor.u32 %v638, 2147483648
  %v751 = vxor.u32 %v639, 2147483648
  %v752 = vxor.u32 %v640, 2147483648
  %v753 = vxor.u32 %v641, 2147483648
  %v754 = vxor.u32 %v642, 2147483648
  %v755 = vxor.u32 %v643, 2147483648
  %v756 = vxor.u32 %v644, 2147483648
  %v757 = vxor.u32 %v645, 2147483648
  %v758 = vxor.u32 %v646, 2147483648
  %v759 = vxor.u32 %v647, 2147483648
  %v760 = vxor.u32 %v648, 2147483648
  %v761 = vxor.u32 %v649, 2147483648
  %v762 = vmul.f32 %v746, 1.442695
  %v763 = vpow.pop %v762
  %v764 = vmul.f32 %v747, 1.442695
  %v765 = vpow.pop %v764
  %v766 = vmul.f32 %v748, 1.442695
  %v767 = vpow.pop %v766
  %v768 = vmul.f32 %v749, 1.442695
  %v769 = vpow.pop %v768
  %v770 = vmul.f32 %v750, 1.442695
  %v771 = vpow.pop %v770
  %v772 = vmul.f32 %v751, 1.442695
  %v773 = vpow.pop %v772
  %v774 = vmul.f32 %v752, 1.442695
  %v775 = vpow.pop %v774
  %v776 = vmul.f32 %v753, 1.442695
  %v777 = vpow.pop %v776
  %v778 = vmul.f32 %v754, 1.442695
  %v779 = vpow.pop %v778
  %v780 = vmul.f32 %v755, 1.442695
  %v781 = vpow.pop %v780
  %v782 = vmul.f32 %v756, 1.442695
  %v783 = vpow.pop %v782
  %v784 = vmul.f32 %v757, 1.442695
  %v785 = vpow.pop %v784
  %v786 = vmul.f32 %v758, 1.442695
  %v787 = vpow.pop %v786
  %v788 = vmul.f32 %v759, 1.442695
  %v789 = vpow.pop %v788
  %v790 = vmul.f32 %v760, 1.442695
  %v791 = vpow.pop %v790
  %v792 = vmul.f32 %v761, 1.442695
  %v793 = vpow.pop %v792
  %v794 = vadd.f32 %v763, 1.0
  %v795 = vadd.f32 %v765, 1.0
  %v796 = vadd.f32 %v767, 1.0
  %v797 = vadd.f32 %v769, 1.0
  %v798 = vadd.f32 %v771, 1.0
  %v799 = vadd.f32 %v773, 1.0
  %v800 = vadd.f32 %v775, 1.0
  %v801 = vadd.f32 %v777, 1.0
  %v802 = vadd.f32 %v779, 1.0
  %v803 = vadd.f32 %v781, 1.0
  %v804 = vadd.f32 %v783, 1.0
  %v805 = vadd.f32 %v785, 1.0
  %v806 = vadd.f32 %v787, 1.0
  %v807 = vadd.f32 %v789, 1.0
  %v808 = vadd.f32 %v791, 1.0
  %v809 = vadd.f32 %v793, 1.0
  %v810 = vrcp.pop %v794
  %v811 = vmul.f32 1.0, %v810
  %v812 = vrcp.pop %v795
  %v813 = vmul.f32 1.0, %v812
  %v814 = vrcp.pop %v796
  %v815 = vmul.f32 1.0, %v814
  %v816 = vrcp.pop %v797
  %v817 = vmul.f32 1.0, %v816
  %v818 = vrcp.pop %v798
  %v819 = vmul.f32 1.0, %v818
  %v820 = vrcp.pop %v799
  %v821 = vmul.f32 1.0, %v820
  %v822 = vrcp.pop %v800
  %v823 = vmul.f32 1.0, %v822
  %v824 = vrcp.pop %v801
  %v825 = vmul.f32 1.0, %v824
  %v826 = vrcp.pop %v802
  %v827 = vmul.f32 1.0, %v826
  %v828 = vrcp.pop %v803
  %v829 = vmul.f32 1.0, %v828
  %v830 = vrcp.pop %v804
  %v831 = vmul.f32 1.0, %v830
  %v832 = vrcp.pop %v805
  %v833 = vmul.f32 1.0, %v832
  %v834 = vrcp.pop %v806
  %v835 = vmul.f32 1.0, %v834
  %v836 = vrcp.pop %v807
  %v837 = vmul.f32 1.0, %v836
  %v838 = vrcp.pop %v808
  %v839 = vmul.f32 1.0, %v838
  %v840 = vrcp.pop %v809
  %v841 = vmul.f32 1.0, %v840
  %843 = vset.pattern.permute.xlu0 0
  %844 = vperm.xlu0 %843, %v715
  %v845 = vpop.permute.xlu0 %844
  %848 = vset.pattern.permute.xlu0 0
  %849 = vperm.xlu0 %848, %v717
  %v850 = vpop.permute.xlu0 %849
  %853 = vset.pattern.permute.xlu0 0
  %854 = vperm.xlu0 %853, %v719
  %v855 = vpop.permute.xlu0 %854
  %858 = vset.pattern.permute.xlu0 0
  %859 = vperm.xlu0 %858, %v721
  %v860 = vpop.permute.xlu0 %859
  %863 = vset.pattern.permute.xlu0 0
  %864 = vperm.xlu0 %863, %v723
  %v865 = vpop.permute.xlu0 %864
  %868 = vset.pattern.permute.xlu0 0
  %869 = vperm.xlu0 %868, %v725
  %v870 = vpop.permute.xlu0 %869
  %873 = vset.pattern.permute.xlu0 0
  %874 = vperm.xlu0 %873, %v727
  %v875 = vpop.permute.xlu0 %874
  %878 = vset.pattern.permute.xlu0 0
  %879 = vperm.xlu0 %878, %v729
  %v880 = vpop.permute.xlu0 %879
  %883 = vset.pattern.permute.xlu0 0
  %884 = vperm.xlu0 %883, %v731
  %v885 = vpop.permute.xlu0 %884
  %888 = vset.pattern.permute.xlu0 0
  %889 = vperm.xlu0 %888, %v733
  %v890 = vpop.permute.xlu0 %889
  %893 = vset.pattern.permute.xlu0 0
  %894 = vperm.xlu0 %893, %v735
  %v895 = vpop.permute.xlu0 %894
  %898 = vset.pattern.permute.xlu0 0
  %899 = vperm.xlu0 %898, %v737
  %v900 = vpop.permute.xlu0 %899
  %903 = vset.pattern.permute.xlu0 0
  %904 = vperm.xlu0 %903, %v739
  %v905 = vpop.permute.xlu0 %904
  %908 = vset.pattern.permute.xlu0 0
  %909 = vperm.xlu0 %908, %v741
  %v910 = vpop.permute.xlu0 %909
  %913 = vset.pattern.permute.xlu0 0
  %914 = vperm.xlu0 %913, %v743
  %v915 = vpop.permute.xlu0 %914
  %918 = vset.pattern.permute.xlu0 0
  %919 = vperm.xlu0 %918, %v745
  %v920 = vpop.permute.xlu0 %919
  %v922 = vmul.f32 %v270, %v845
  %v923 = vmul.f32 %v271, %v850
  %v924 = vmul.f32 %v272, %v855
  %v925 = vmul.f32 %v273, %v860
  %v926 = vmul.f32 %v274, %v865
  %v927 = vmul.f32 %v275, %v870
  %v928 = vmul.f32 %v276, %v875
  %v929 = vmul.f32 %v277, %v880
  %v930 = vmul.f32 %v278, %v885
  %v931 = vmul.f32 %v279, %v890
  %v932 = vmul.f32 %v280, %v895
  %v933 = vmul.f32 %v281, %v900
  %v934 = vmul.f32 %v282, %v905
  %v935 = vmul.f32 %v283, %v910
  %v936 = vmul.f32 %v284, %v915
  %v937 = vmul.f32 %v285, %v920
  %939 = vset.pattern.permute.xlu0 1
  %940 = vperm.xlu0 %939, %v811
  %v941 = vpop.permute.xlu0 %940
  %944 = vset.pattern.permute.xlu0 1
  %945 = vperm.xlu0 %944, %v813
  %v946 = vpop.permute.xlu0 %945
  %949 = vset.pattern.permute.xlu0 1
  %950 = vperm.xlu0 %949, %v815
  %v951 = vpop.permute.xlu0 %950
  %954 = vset.pattern.permute.xlu0 1
  %955 = vperm.xlu0 %954, %v817
  %v956 = vpop.permute.xlu0 %955
  %959 = vset.pattern.permute.xlu0 1
  %960 = vperm.xlu0 %959, %v819
  %v961 = vpop.permute.xlu0 %960
  %964 = vset.pattern.permute.xlu0 1
  %965 = vperm.xlu0 %964, %v821
  %v966 = vpop.permute.xlu0 %965
  %969 = vset.pattern.permute.xlu0 1
  %970 = vperm.xlu0 %969, %v823
  %v971 = vpop.permute.xlu0 %970
  %974 = vset.pattern.permute.xlu0 1
  %975 = vperm.xlu0 %974, %v825
  %v976 = vpop.permute.xlu0 %975
  %979 = vset.pattern.permute.xlu0 1
  %980 = vperm.xlu0 %979, %v827
  %v981 = vpop.permute.xlu0 %980
  %984 = vset.pattern.permute.xlu0 1
  %985 = vperm.xlu0 %984, %v829
  %v986 = vpop.permute.xlu0 %985
  %989 = vset.pattern.permute.xlu0 1
  %990 = vperm.xlu0 %989, %v831
  %v991 = vpop.permute.xlu0 %990
  %994 = vset.pattern.permute.xlu0 1
  %995 = vperm.xlu0 %994, %v833
  %v996 = vpop.permute.xlu0 %995
  %999 = vset.pattern.permute.xlu0 1
  %1000 = vperm.xlu0 %999, %v835
  %v1001 = vpop.permute.xlu0 %1000
  %1004 = vset.pattern.permute.xlu0 1
  %1005 = vperm.xlu0 %1004, %v837
  %v1006 = vpop.permute.xlu0 %1005
  %1009 = vset.pattern.permute.xlu0 1
  %1010 = vperm.xlu0 %1009, %v839
  %v1011 = vpop.permute.xlu0 %1010
  %1014 = vset.pattern.permute.xlu0 1
  %1015 = vperm.xlu0 %1014, %v841
  %v1016 = vpop.permute.xlu0 %1015
  %v1018 = vmul.f32 %v286, %v941
  %v1019 = vmul.f32 %v287, %v946
  %v1020 = vmul.f32 %v288, %v951
  %v1021 = vmul.f32 %v289, %v956
  %v1022 = vmul.f32 %v290, %v961
  %v1023 = vmul.f32 %v291, %v966
  %v1024 = vmul.f32 %v292, %v971
  %v1025 = vmul.f32 %v293, %v976
  %v1026 = vmul.f32 %v294, %v981
  %v1027 = vmul.f32 %v295, %v986
  %v1028 = vmul.f32 %v296, %v991
  %v1029 = vmul.f32 %v297, %v996
  %v1030 = vmul.f32 %v298, %v1001
  %v1031 = vmul.f32 %v299, %v1006
  %v1032 = vmul.f32 %v300, %v1011
  %v1033 = vmul.f32 %v301, %v1016
  %v1034 = vadd.f32 %v922, %v1018
  %v1035 = vadd.f32 %v923, %v1019
  %v1036 = vadd.f32 %v924, %v1020
  %v1037 = vadd.f32 %v925, %v1021
  %v1038 = vadd.f32 %v926, %v1022
  %v1039 = vadd.f32 %v927, %v1023
  %v1040 = vadd.f32 %v928, %v1024
  %v1041 = vadd.f32 %v929, %v1025
  %v1042 = vadd.f32 %v930, %v1026
  %v1043 = vadd.f32 %v931, %v1027
  %v1044 = vadd.f32 %v932, %v1028
  %v1045 = vadd.f32 %v933, %v1029
  %v1046 = vadd.f32 %v934, %v1030
  %v1047 = vadd.f32 %v935, %v1031
  %v1048 = vadd.f32 %v936, %v1032
  %v1049 = vadd.f32 %v937, %v1033
  %1050 = vst.msk [vmem:[%s8] sm:$0xff] %vm324, %v1034
  %1051 = vst.msk [vmem:[%s8 + $0x8] sm:$0xff] %vm324, %v1035
  %1052 = vst.msk [vmem:[%s8 + $0x10] sm:$0xff] %vm324, %v1036
  %1053 = vst.msk [vmem:[%s8 + $0x18] sm:$0xff] %vm324, %v1037
  %1054 = vst.msk [vmem:[%s8 + $0x20] sm:$0xff] %vm324, %v1038
  %1055 = vst.msk [vmem:[%s8 + $0x28] sm:$0xff] %vm324, %v1039
  %1056 = vst.msk [vmem:[%s8 + $0x30] sm:$0xff] %vm324, %v1040
  %1057 = vst.msk [vmem:[%s8 + $0x38] sm:$0xff] %vm324, %v1041
  %1058 = vst.msk [vmem:[%s8 + $0x40] sm:$0xff] %vm324, %v1042
  %1059 = vst.msk [vmem:[%s8 + $0x48] sm:$0xff] %vm324, %v1043
  %1060 = vst.msk [vmem:[%s8 + $0x50] sm:$0xff] %vm324, %v1044
  %1061 = vst.msk [vmem:[%s8 + $0x58] sm:$0xff] %vm324, %v1045
  %1062 = vst.msk [vmem:[%s8 + $0x60] sm:$0xff] %vm324, %v1046
  %1063 = vst.msk [vmem:[%s8 + $0x68] sm:$0xff] %vm324, %v1047
  %1064 = vst.msk [vmem:[%s8 + $0x70] sm:$0xff] %vm324, %v1048
  %1065 = vst.msk [vmem:[%s8 + $0x78] sm:$0xff] %vm324, %v1049
  // Predicated region
  $region34: #{tpu_custom_call.1} parent=0 // pred_check
    _
  $region35: #{tpu_custom_call.1} parent=0 // pred_check_branch
    %1067 = sbr.rel (0) target = $region37
  $region36: #{tpu_custom_call.1} parent=0 // pred_region
    _
  $region37: #{tpu_custom_call.1} parent=0 // pred_fallthru
    _
  // Predicated region
  $region38: #{tpu_custom_call.1} parent=0 // pred_check
    _
  $region39: #{tpu_custom_call.1} parent=0 // pred_check_branch
    %1069 = sbr.rel (0) target = $region41
  $region40: #{tpu_custom_call.1} parent=0 // pred_region
    _
  $region41: #{tpu_custom_call.1} parent=0 // pred_fallthru
    _

</llo_original>
